<compile_context>
chip_gen: v7x
topology: tpu7x:2x2x1
jax: 0.10.0
libtpu: 0.0.40
codegen_flags: <defaults>
</compile_context>

<pallas_src>
import functools

import jax
import jax.numpy as jnp
from jax import lax
from jax.experimental import pallas as pl
from jax.experimental.pallas import tpu as pltpu


# ---------------------------------------------------------------------------
# Kernel: flat retina gather + VPU layer A + one bf16 MXU dot for layer B
# ---------------------------------------------------------------------------
def glimpse_kernel(x_ref, l_ref, wphi_ref, wl_ref, ba_ref, wb_ref, bb_ref, o_ref,
                   *, H, W):
    x_flat = x_ref[...]                    # (Bt, H*W) f32
    l = l_ref[...]                         # (Bt, 2)   f32
    Bt = x_flat.shape[0]

    # --- Retina.foveate (g = c = 1): pick the pixel at the denormalized loc ---
    # denormalize: (0.5 * ((coords + 1) * H)).long(); spec uses H for both axes.
    coords = 0.5 * (l + 1.0) * jnp.float32(H)
    idx = coords.astype(jnp.int32)         # trunc-toward-zero == torch .long() for >= 0
    col = jnp.clip(idx[:, 0:1], 0, W - 1)  # l[:, 0] -> column
    row = jnp.clip(idx[:, 1:2], 0, H - 1)  # l[:, 1] -> row
    flat_idx = row * W + col               # (Bt, 1)

    # Flat one-hot gather: one iota, one compare/select, one lane-axis reduce.
    lane = lax.broadcasted_iota(jnp.int32, (Bt, H * W), 1)
    pix = jnp.sum(jnp.where(lane == flat_idx, x_flat, 0.0),
                  axis=1, keepdims=True)   # (Bt, 1)

    # --- Layer A (fc1 + fc2) as three broadcast FMAs on one (Bt, h_pad) tile ---
    # fc1(phi) with phi = pix repeated k times == pix * rowsum_k(W1)  (-> cols [0, h_g))
    # fc2(l)   == l0 * W2^T[0] + l1 * W2^T[1]                          (-> cols [h_g, h_out))
    z = (pix * wphi_ref[...]
         + l[:, 0:1] * wl_ref[0:1, :]
         + l[:, 1:2] * wl_ref[1:2, :]
         + ba_ref[...])
    z = jnp.maximum(z, 0.0)

    # --- Layer B (fc3 + fc4 stacked): one MXU dot, bf16 operands, f32 accumulate ---
    g_t = jnp.dot(z.astype(jnp.bfloat16), wb_ref[...],
                  preferred_element_type=jnp.float32) + bb_ref[...]
    o_ref[...] = jnp.maximum(g_t, 0.0).astype(o_ref.dtype)


# ---------------------------------------------------------------------------
# One-time parameter fusion (outside the forward, NOT per call)
# ---------------------------------------------------------------------------
def prepare_fused_params(w1, b1, w2, b2, w3, b3, w4, b4, *, k, g, c, h_g, h_l):
    """Fuse the four nn.Linear layers into lane-dense kernels.

    Layer A collapses to broadcast FMAs:
        wphi = [rowsum_k(W1), 0...]  : (1, h_pad)   (valid because g = c = 1 and
                                                     phi is one pixel repeated k times)
        wl   = [[0, W2^T]]           : (2, h_pad)
        ba   = [b1, b2, 0...]        : (1, h_pad)
    Layer B is one stacked matmul (bf16 operands, f32 accumulate):
        wb   = [[W3^T], [W4^T]]      : (h_pad, h_pad) bf16
        bb   = b3 + b4 (padded)      : (1, h_pad)
    h_pad = h_g + h_l rounded up to a multiple of 128 (lane-dense stores).
    """
    assert g == 1 and c == 1, "this spec's Retina only supports g == 1, c == 1"
    h_out = h_g + h_l
    h_pad = ((h_out + 127) // 128) * 128

    wphi = jnp.zeros((1, h_pad), jnp.float32).at[0, :h_g].set(jnp.sum(w1, axis=1))
    wl = jnp.zeros((2, h_pad), jnp.float32).at[:, h_g:h_out].set(w2.T)
    ba = (jnp.zeros((1, h_pad), jnp.float32)
          .at[0, :h_g].set(b1).at[0, h_g:h_out].set(b2))

    wb = jnp.zeros((h_pad, h_pad), jnp.float32)
    wb = wb.at[:h_g, :h_out].set(w3.T)
    wb = wb.at[h_g:h_out, :h_out].set(w4.T)
    wb = wb.astype(jnp.bfloat16)
    bb = jnp.zeros((1, h_pad), jnp.float32).at[0, :h_out].set(b3 + b4)

    return wphi, wl, ba, wb, bb


# ---------------------------------------------------------------------------
# Forward wrapper
# ---------------------------------------------------------------------------
def glimpse_forward(x, l_t_prev, fused_params, *, h_g, h_l, batch_block=256):
    """x: (B, 1, H, W) f32, l_t_prev: (B, 2) f32 in [-1, 1]. Returns (B, h_g+h_l)."""
    wphi, wl, ba, wb, bb = fused_params
    B, C, H, W = x.shape
    assert C == 1, "this spec's Retina.extract_patch only supports a single channel"

    x_flat = x.reshape(B, H * W)           # metadata-only; lane-dense gather + one DMA
    h_pad = wb.shape[1]
    h_out = h_g + h_l

    bt = min(B, batch_block)               # >=256 useful on v7x (2 TCs); 8..128 is fine here
    assert B % bt == 0, "pad batch to a multiple of the batch block"
    grid = (B // bt,)

    const = lambda b: (0, 0)               # weights stay VMEM-resident across the grid
    out = pl.pallas_call(
        functools.partial(glimpse_kernel, H=H, W=W),
        out_shape=jax.ShapeDtypeStruct((B, h_pad), jnp.float32),
        grid_spec=pltpu.PrefetchScalarGridSpec(
            num_scalar_prefetch=0,
            grid=grid,
            in_specs=[
                pl.BlockSpec((bt, H * W), lambda b: (b, 0)),   # x_flat
                pl.BlockSpec((bt, 2), lambda b: (b, 0)),       # l
                pl.BlockSpec((1, h_pad), const),               # wphi
                pl.BlockSpec((2, h_pad), const),               # wl
                pl.BlockSpec((1, h_pad), const),               # ba
                pl.BlockSpec((h_pad, h_pad), const),           # wb (bf16)
                pl.BlockSpec((1, h_pad), const),               # bb
            ],
            out_specs=pl.BlockSpec((bt, h_pad), lambda b: (b, 0)),
        ),
        compiler_params=pltpu.CompilerParams(dimension_semantics=("parallel",)),
    )(x_flat, l_t_prev, wphi, wl, ba, wb, bb)

    # Example uses h_g + h_l == 128, so this is the padded block itself (no copy).
    return out if h_pad == h_out else out[:, :h_out]


# ---------------------------------------------------------------------------
# Deterministic init matching nn.Linear defaults U(-1/sqrt(fan_in), +1/sqrt(fan_in))
# ---------------------------------------------------------------------------
def init_params(key, *, k, g, c, h_g, h_l):
    d_phi = k * g * g * c
    h_out = h_g + h_l
    keys = jax.random.split(key, 8)

    def lin(kw, kb, fan_in, fan_out):
        bound = 1.0 / jnp.sqrt(jnp.float32(fan_in))
        w = jax.random.uniform(kw, (fan_out, fan_in), jnp.float32, -bound, bound)
        b = jax.random.uniform(kb, (fan_out,), jnp.float32, -bound, bound)
        return w, b

    w1, b1 = lin(keys[0], keys[1], d_phi, h_g)
    w2, b2 = lin(keys[2], keys[3], 2, h_l)
    w3, b3 = lin(keys[4], keys[5], h_g, h_out)
    w4, b4 = lin(keys[6], keys[7], h_l, h_out)
    return w1, b1, w2, b2, w3, b3, w4, b4


# ---------------------------------------------------------------------------
# Pure-JAX f32 reference (mirrors the PyTorch module exactly)
# ---------------------------------------------------------------------------
def reference_forward(x, l, params, *, k):
    w1, b1, w2, b2, w3, b3, w4, b4 = params
    B, C, H, W = x.shape
    start = (0.5 * ((l + 1.0) * H)).astype(jnp.int32)
    pix = x[jnp.arange(B), 0, start[:, 1], start[:, 0]]          # (B,)
    phi = jnp.tile(pix[:, None], (1, k))                         # (B, k)
    phi_out = jnp.maximum(phi @ w1.T + b1, 0.0)
    l_out = jnp.maximum(l @ w2.T + b2, 0.0)
    return jnp.maximum(phi_out @ w3.T + b3 + l_out @ w4.T + b4, 0.0)


if __name__ == "__main__":
    # Spec-consistent shapes: g = c = 1 (required by this Retina), k = 3 patches,
    # h_g + h_l = 128 so the fused output is exactly lane-dense (one f32 vreg row-block).
    B, H, W, C = 8, 16, 16, 1
    g, k, s = 1, 3, 2
    h_g, h_l = 96, 32

    key = jax.random.PRNGKey(0)
    kp, kx, kl = jax.random.split(key, 3)

    params = init_params(kp, k=k, g=g, c=C, h_g=h_g, h_l=h_l)
    fused = prepare_fused_params(*params, k=k, g=g, c=C, h_g=h_g, h_l=h_l)

    x = jax.random.normal(kx, (B, C, H, W), jnp.float32)
    # keep locations strictly inside the image so denormalized indices match torch indexing
    l_t_prev = jax.random.uniform(kl, (B, 2), jnp.float32, minval=-0.9, maxval=0.9)

    g_t = glimpse_forward(x, l_t_prev, fused, h_g=h_g, h_l=h_l)
    g_t = jax.block_until_ready(g_t)

    ref = reference_forward(x, l_t_prev, params, k=k)
    assert g_t.shape == (B, h_g + h_l)
    # Layer B runs with bf16 MXU operands (f32 accumulate), so compare at bf16-level tolerance.
    assert jnp.allclose(g_t, ref, atol=1e-2, rtol=1e-2), float(jnp.max(jnp.abs(g_t - ref)))

    print("KERNEL_OK")
</pallas_src>

<mosaic_0001>
module attributes {stable_mosaic.version = 11 : i64} {
  func.func @glimpse_kernel(%arg0: i32, %arg1: memref<8x256xf32, #tpu.memory_space<vmem>>, %arg2: memref<8x2xf32, #tpu.memory_space<vmem>>, %arg3: memref<1x128xf32, #tpu.memory_space<vmem>>, %arg4: memref<2x128xf32, #tpu.memory_space<vmem>>, %arg5: memref<1x128xf32, #tpu.memory_space<vmem>>, %arg6: memref<128x128xbf16, #tpu.memory_space<vmem>>, %arg7: memref<1x128xf32, #tpu.memory_space<vmem>>, %arg8: memref<8x128xf32, #tpu.memory_space<vmem>>) attributes {dimension_semantics = [#tpu.dimension_semantics<parallel>], iteration_bounds = array<i64: 1>, scalar_prefetch = 0 : i64, scratch_operands = 0 : i64, tpu.core_type = #tpu.core_type<tc>, window_params = [{transform_indices = @transform_0, window_bounds = array<i64: 8, 256>}, {transform_indices = @transform_1, window_bounds = array<i64: 8, 2>}, {pipeline_mode = #tpu.pipeline_mode<synchronous>, transform_indices = @transform_2, window_bounds = array<i64: 1, 128>}, {pipeline_mode = #tpu.pipeline_mode<synchronous>, transform_indices = @transform_3, window_bounds = array<i64: 2, 128>}, {pipeline_mode = #tpu.pipeline_mode<synchronous>, transform_indices = @transform_4, window_bounds = array<i64: 1, 128>}, {pipeline_mode = #tpu.pipeline_mode<synchronous>, transform_indices = @transform_5, window_bounds = array<i64: 128, 128>}, {pipeline_mode = #tpu.pipeline_mode<synchronous>, transform_indices = @transform_6, window_bounds = array<i64: 1, 128>}, {transform_indices = @transform_7, window_bounds = array<i64: 8, 128>}]} {
    %c0 = arith.constant 0 : index
    %c0_0 = arith.constant 0 : index
    %0 = vector.load %arg1[%c0, %c0_0] : memref<8x256xf32, #tpu.memory_space<vmem>>, vector<8x256xf32>
    %c0_1 = arith.constant 0 : index
    %c0_2 = arith.constant 0 : index
    %1 = vector.load %arg2[%c0_1, %c0_2] : memref<8x2xf32, #tpu.memory_space<vmem>>, vector<8x2xf32>
    %cst = arith.constant 1.000000e+00 : f32
    %2 = vector.broadcast %cst : f32 to vector<8x2xf32>
    %3 = arith.addf %1, %2 : vector<8x2xf32>
    %cst_3 = arith.constant 5.000000e-01 : f32
    %4 = vector.broadcast %cst_3 : f32 to vector<8x2xf32>
    %5 = arith.mulf %4, %3 : vector<8x2xf32>
    %cst_4 = arith.constant 1.600000e+01 : f32
    %6 = vector.broadcast %cst_4 : f32 to vector<8x2xf32>
    %7 = arith.mulf %5, %6 : vector<8x2xf32>
    %8 = arith.fptosi %7 : vector<8x2xf32> to vector<8x2xi32>
    %9 = vector.extract_strided_slice %8 {offsets = [0, 0], sizes = [8, 1], strides = [1, 1]} : vector<8x2xi32> to vector<8x1xi32>
    %c0_i32 = arith.constant 0 : i32
    %c15_i32 = arith.constant 15 : i32
    %10 = vector.broadcast %c0_i32 : i32 to vector<8x1xi32>
    %11 = arith.maxsi %10, %9 : vector<8x1xi32>
    %12 = vector.broadcast %c15_i32 : i32 to vector<8x1xi32>
    %13 = arith.minsi %12, %11 : vector<8x1xi32>
    %14 = vector.extract_strided_slice %8 {offsets = [0, 1], sizes = [8, 1], strides = [1, 1]} : vector<8x2xi32> to vector<8x1xi32>
    %c0_i32_5 = arith.constant 0 : i32
    %c15_i32_6 = arith.constant 15 : i32
    %15 = vector.broadcast %c0_i32_5 : i32 to vector<8x1xi32>
    %16 = arith.maxsi %15, %14 : vector<8x1xi32>
    %17 = vector.broadcast %c15_i32_6 : i32 to vector<8x1xi32>
    %18 = arith.minsi %17, %16 : vector<8x1xi32>
    %c16_i32 = arith.constant 16 : i32
    %19 = vector.broadcast %c16_i32 : i32 to vector<8x1xi32>
    %20 = arith.muli %18, %19 : vector<8x1xi32>
    %21 = arith.addi %20, %13 : vector<8x1xi32>
    %22 = tpu.iota {dimensions = array<i32: 1>} : vector<8x256xi32>
    %23 = vector.broadcast %21 : vector<8x1xi32> to vector<8x256xi32>
    %24 = arith.cmpi eq, %22, %23 : vector<8x256xi32>
    %cst_7 = arith.constant 0.000000e+00 : f32
    %25 = vector.broadcast %cst_7 : f32 to vector<8x256xf32>
    %26 = arith.select %24, %0, %25 : vector<8x256xi1>, vector<8x256xf32>
    %cst_8 = arith.constant dense<0.000000e+00> : vector<8xf32>
    %27 = vector.multi_reduction <add>, %26, %cst_8 [1] : vector<8x256xf32> to vector<8xf32>
    %28 = vector.shape_cast %27 : vector<8xf32> to vector<8x1xf32>
    %c0_9 = arith.constant 0 : index
    %c0_10 = arith.constant 0 : index
    %29 = vector.load %arg3[%c0_9, %c0_10] : memref<1x128xf32, #tpu.memory_space<vmem>>, vector<1x128xf32>
    %30 = vector.broadcast %28 : vector<8x1xf32> to vector<8x128xf32>
    %31 = vector.broadcast %29 : vector<1x128xf32> to vector<8x128xf32>
    %32 = arith.mulf %30, %31 : vector<8x128xf32>
    %33 = vector.extract_strided_slice %1 {offsets = [0, 0], sizes = [8, 1], strides = [1, 1]} : vector<8x2xf32> to vector<8x1xf32>
    %c0_11 = arith.constant 0 : index
    %c0_12 = arith.constant 0 : index
    %34 = vector.load %arg4[%c0_11, %c0_12] : memref<2x128xf32, #tpu.memory_space<vmem>>, vector<1x128xf32>
    %35 = vector.broadcast %33 : vector<8x1xf32> to vector<8x128xf32>
    %36 = vector.broadcast %34 : vector<1x128xf32> to vector<8x128xf32>
    %37 = arith.mulf %35, %36 : vector<8x128xf32>
    %38 = arith.addf %32, %37 : vector<8x128xf32>
    %39 = vector.extract_strided_slice %1 {offsets = [0, 1], sizes = [8, 1], strides = [1, 1]} : vector<8x2xf32> to vector<8x1xf32>
    %c1 = arith.constant 1 : index
    %c0_13 = arith.constant 0 : index
    %40 = vector.load %arg4[%c1, %c0_13] : memref<2x128xf32, #tpu.memory_space<vmem>>, vector<1x128xf32>
    %41 = vector.broadcast %39 : vector<8x1xf32> to vector<8x128xf32>
    %42 = vector.broadcast %40 : vector<1x128xf32> to vector<8x128xf32>
    %43 = arith.mulf %41, %42 : vector<8x128xf32>
    %44 = arith.addf %38, %43 : vector<8x128xf32>
    %c0_14 = arith.constant 0 : index
    %c0_15 = arith.constant 0 : index
    %45 = vector.load %arg5[%c0_14, %c0_15] : memref<1x128xf32, #tpu.memory_space<vmem>>, vector<1x128xf32>
    %46 = vector.broadcast %45 : vector<1x128xf32> to vector<8x128xf32>
    %47 = arith.addf %44, %46 : vector<8x128xf32>
    %cst_16 = arith.constant 0.000000e+00 : f32
    %48 = vector.broadcast %cst_16 : f32 to vector<8x128xf32>
    %49 = arith.maximumf %47, %48 : vector<8x128xf32>
    %50 = arith.truncf %49 : vector<8x128xf32> to vector<8x128xbf16>
    %c0_17 = arith.constant 0 : index
    %c0_18 = arith.constant 0 : index
    %51 = vector.load %arg6[%c0_17, %c0_18] : memref<128x128xbf16, #tpu.memory_space<vmem>>, vector<128x128xbf16>
    %cst_19 = arith.constant dense<0.000000e+00> : vector<8x128xf32>
    %52 = tpu.matmul %50, %51, %cst_19 {dimension_numbers = #tpu.dot_dimension_numbers<[1], [0], [0], [1], [0, 0, 1, 1], [], []>} : vector<8x128xbf16>, vector<128x128xbf16>, vector<8x128xf32> -> vector<8x128xf32>
    %c0_20 = arith.constant 0 : index
    %c0_21 = arith.constant 0 : index
    %53 = vector.load %arg7[%c0_20, %c0_21] : memref<1x128xf32, #tpu.memory_space<vmem>>, vector<1x128xf32>
    %54 = vector.broadcast %53 : vector<1x128xf32> to vector<8x128xf32>
    %55 = arith.addf %52, %54 : vector<8x128xf32>
    %cst_22 = arith.constant 0.000000e+00 : f32
    %56 = vector.broadcast %cst_22 : f32 to vector<8x128xf32>
    %57 = arith.maximumf %55, %56 : vector<8x128xf32>
    %c0_23 = arith.constant 0 : index
    %c0_24 = arith.constant 0 : index
    %58 = vector.load %arg8[%c0_23, %c0_24] : memref<8x128xf32, #tpu.memory_space<vmem>>, vector<8x128xf32>
    tpu.vector_store %arg8[%c0_23, %c0_24], %57 {strides = array<i32>} : memref<8x128xf32, #tpu.memory_space<vmem>>, vector<8x128xf32>,
    return
  }
  func.func @transform_0(%arg0: i32) -> (i32, i32) {
    %c0_i32 = arith.constant 0 : i32
    %c0_i32_0 = arith.constant 0 : i32
    return %arg0, %c0_i32 : i32, i32
  }
  func.func @transform_1(%arg0: i32) -> (i32, i32) {
    %c0_i32 = arith.constant 0 : i32
    %c0_i32_0 = arith.constant 0 : i32
    return %arg0, %c0_i32 : i32, i32
  }
  func.func @transform_2(%arg0: i32) -> (i32, i32) {
    %c0_i32 = arith.constant 0 : i32
    %c0_i32_0 = arith.constant 0 : i32
    %c0_i32_1 = arith.constant 0 : i32
    return %c0_i32, %c0_i32_0 : i32, i32
  }
  func.func @transform_3(%arg0: i32) -> (i32, i32) {
    %c0_i32 = arith.constant 0 : i32
    %c0_i32_0 = arith.constant 0 : i32
    %c0_i32_1 = arith.constant 0 : i32
    return %c0_i32, %c0_i32_0 : i32, i32
  }
  func.func @transform_4(%arg0: i32) -> (i32, i32) {
    %c0_i32 = arith.constant 0 : i32
    %c0_i32_0 = arith.constant 0 : i32
    %c0_i32_1 = arith.constant 0 : i32
    return %c0_i32, %c0_i32_0 : i32, i32
  }
  func.func @transform_5(%arg0: i32) -> (i32, i32) {
    %c0_i32 = arith.constant 0 : i32
    %c0_i32_0 = arith.constant 0 : i32
    %c0_i32_1 = arith.constant 0 : i32
    return %c0_i32, %c0_i32_0 : i32, i32
  }
  func.func @transform_6(%arg0: i32) -> (i32, i32) {
    %c0_i32 = arith.constant 0 : i32
    %c0_i32_0 = arith.constant 0 : i32
    %c0_i32_1 = arith.constant 0 : i32
    return %c0_i32, %c0_i32_0 : i32, i32
  }
  func.func @transform_7(%arg0: i32) -> (i32, i32) {
    %c0_i32 = arith.constant 0 : i32
    %c0_i32_0 = arith.constant 0 : i32
    return %arg0, %c0_i32 : i32, i32
  }
}

</mosaic_0001>

<llo_original>
// kernel: tpu_custom_call.1
$region0: #{tpu_custom_call.1}
  #allocation0 [shape = 'u32[]', space=smem, size = 0x4, offset = 0x4, fixed_abs, tag = 'smem constant byte address 0x4 - core index']
  #allocation1 [shape = 'u32[144,128]{1,0:T(1,128)}', space=vmem, size = 0x12000, scoped, tag = 'internal scratch']
  %s0 = inlined_call_operand.hbm [shape: f32[8,256], index: 0, kind: input, shape index: {}]
  %s1 = inlined_call_operand.vmem [shape: f32[8,2], index: 1, kind: input, shape index: {}]
  %s2 = inlined_call_operand.vmem [shape: f32[1,128], index: 2, kind: input, shape index: {}]
  %s3 = inlined_call_operand.vmem [shape: f32[2,128], index: 3, kind: input, shape index: {}]
  %s4 = inlined_call_operand.vmem [shape: f32[1,128], index: 4, kind: input, shape index: {}]
  %s5 = inlined_call_operand.hbm [shape: bf16[128,128], index: 5, kind: input, shape index: {}]
  %s6 = inlined_call_operand.vmem [shape: f32[1,128], index: 6, kind: input, shape index: {}]
  %s7 = inlined_call_operand.hbm [shape: f32[8,128], index: 7, kind: output, shape index: {}]
  %s8 = sld [smem:[#allocation0]]
  $region46: #{tpu_custom_call.1} parent=0
    _
  %s10 = ssub.s32 1, %s8
  %s11 = scalar_select 0, %s10, %s8
  $region1: #{tpu_custom_call.1} parent=0
    #allocation2 [shape = 'u8[8192]{0}', space=vmem, size = 0x2000, scoped, tag = 'input window, operand 0, single buffered']
    #allocation3 [shape = 's32[1]{0}', space=sflag, size = 0x4, scoped, tag = 'scoped memory for tpu_custom_call.1']
    #allocation4 [shape = 's32[1]{0}', space=sflag, size = 0x4, scoped, tag = 'scoped memory for tpu_custom_call.1']
    #allocation5 [shape = 'u8[32768]{0}', space=vmem, size = 0x8000, scoped, tag = 'input window, operand 5, single buffered']
    #allocation6 [shape = 's32[1]{0}', space=sflag, size = 0x4, scoped, tag = 'scoped memory for tpu_custom_call.1']
    #allocation7 [shape = 'u8[4096]{0}', space=vmem, size = 0x1000, scoped, tag = 'output window, operand 0, single buffered']
    %12 = vsyncpa [#allocation3], 0
    %13 = vsyncpa [#allocation6], 0
    %14 = vsyncpa [#allocation4], 0
    // Predicated region
    $region2: #{tpu_custom_call.1} parent=1 // pred_check
      _
    $region3: #{tpu_custom_call.1} parent=1 // pred_check_branch
      %16 = sbr.rel (0) target = $region5
    $region4: #{tpu_custom_call.1} parent=1 // pred_region
      %s18 = ssub.s32 256, 256
      %19 = vsyncadd [#allocation3], %s18
      %s21 = sshll.u32 [#allocation2], 4
      %s22 = int_to_ptr.vmem [resolvable:$true] %s21
      %24 = dma.hbm_to_vmem [thread:$0]  %s0, 256, %s22, [#allocation3]
    $region5: #{tpu_custom_call.1} parent=1 // pred_fallthru
      _
    // Predicated region
    $region6: #{tpu_custom_call.1} parent=1 // pred_check
      _
    $region7: #{tpu_custom_call.1} parent=1 // pred_check_branch
      %26 = sbr.rel (0) target = $region9
    $region8: #{tpu_custom_call.1} parent=1 // pred_region
      _
    $region9: #{tpu_custom_call.1} parent=1 // pred_fallthru
      _
    // Predicated region
    $region10: #{tpu_custom_call.1} parent=1 // pred_check
      _
    $region11: #{tpu_custom_call.1} parent=1 // pred_check_branch
      %28 = sbr.rel (0) target = $region13
    $region12: #{tpu_custom_call.1} parent=1 // pred_region
      _
    $region13: #{tpu_custom_call.1} parent=1 // pred_fallthru
      _
    // Predicated region
    $region14: #{tpu_custom_call.1} parent=1 // pred_check
      _
    $region15: #{tpu_custom_call.1} parent=1 // pred_check_branch
      %30 = sbr.rel (0) target = $region17
    $region16: #{tpu_custom_call.1} parent=1 // pred_region
      _
    $region17: #{tpu_custom_call.1} parent=1 // pred_fallthru
      _
    // Predicated region
    $region18: #{tpu_custom_call.1} parent=1 // pred_check
      _
    $region19: #{tpu_custom_call.1} parent=1 // pred_check_branch
      %32 = sbr.rel (0) target = $region21
    $region20: #{tpu_custom_call.1} parent=1 // pred_region
      _
    $region21: #{tpu_custom_call.1} parent=1 // pred_fallthru
      _
    // Predicated region
    $region22: #{tpu_custom_call.1} parent=1 // pred_check
      _
    $region23: #{tpu_custom_call.1} parent=1 // pred_check_branch
      %34 = sbr.rel (0) target = $region25
    $region24: #{tpu_custom_call.1} parent=1 // pred_region
      %s36 = ssub.s32 1024, 1024
      %37 = vsyncadd [#allocation6], %s36
      %s38 = sshll.u32 [#allocation5], 4
      %s39 = int_to_ptr.vmem [resolvable:$true] %s38
      %44 = dma.hbm_to_vmem [thread:$0]  %s5, 1024, %s39, [#allocation6], 64, 64, 4
    $region25: #{tpu_custom_call.1} parent=1 // pred_fallthru
      _
    // Predicated region
    $region26: #{tpu_custom_call.1} parent=1 // pred_check
      _
    $region27: #{tpu_custom_call.1} parent=1 // pred_check_branch
      %46 = sbr.rel (0) target = $region29
    $region28: #{tpu_custom_call.1} parent=1 // pred_region
      _
    $region29: #{tpu_custom_call.1} parent=1 // pred_fallthru
      _
    // Predicated region
    $region30: #{tpu_custom_call.1} parent=1 // pred_check
      _
    $region31: #{tpu_custom_call.1} parent=1 // pred_check_branch
      %48 = sbr.rel (0) target = $region33
    $region32: #{tpu_custom_call.1} parent=1 // pred_region
      %49 = dma.done [#allocation3], 256
    $region33: #{tpu_custom_call.1} parent=1 // pred_fallthru
      _
    // Predicated region
    $region34: #{tpu_custom_call.1} parent=1 // pred_check
      _
    $region35: #{tpu_custom_call.1} parent=1 // pred_check_branch
      %51 = sbr.rel (0) target = $region37
    $region36: #{tpu_custom_call.1} parent=1 // pred_region
      %52 = dma.done [#allocation6], 1024
    $region37: #{tpu_custom_call.1} parent=1 // pred_fallthru
      _
    %v54 = vld [vmem:[#allocation2] sm:$0xff]
    %v55 = vld [vmem:[#allocation2 + $0x8] sm:$0xff]
    %v56 = vld [vmem:[%s1] sm:$0xff]
    %v57 = vadd.f32 %v56, 1.0
    %v58 = vmul.f32 %v57, 0.5
    %v59 = vmul.f32 %v58, 16.0
    %v60 = vcvt.f32.s32.to.zero.pseudo %v59
    %vm61 = vcmp.gt.s32.totalorder %v60, 0
    %v62 = vsel %vm61, %v60, 0
    %vm63 = vcmp.lt.s32.totalorder %v62, 15
    %v64 = vsel %vm63, %v62, 15
    %v65 = vmul.u32 %v64, 16
    %66 = vrot.lane.b32.xlu0 %v64, 1
    %v67 = vpop.permute.xlu0 %66
    %v68 = vadd.s32 %v65, %v67
    %v69 = vlaneseq
    %v70 = vand.u32 %v69, 127
    %v71 = vadd.s32 %v70, 128
    %72 = vset.pattern.permute.xlu0 1
    %73 = vperm.xlu0 %72, %v68
    %v74 = vpop.permute.xlu0 %73
    %vm75 = vcmp.eq.s32.totalorder %v70, %v74
    %vm76 = vcmp.eq.s32.totalorder %v71, %v74
    %v77 = vsel %vm75, %v54, 0.0
    %v78 = vsel %vm76, %v55, 0.0
    %v79 = vadd.f32 %v77, %v78
    %80 = vadd.xlane.f32.xlu0 %v79
    %v81 = vpop.xlane.xlu0 %80
    %v82 = vld [vmem:[%s2] sm:$0x1]
    %v84 = vlaneseq
    %v85 = vshrl.u32 %v84, 7
    %v86 = vsub.s32 0, %v85
    %v87 = vrot.slane %v82, %v86
    %v89 = vmul.f32 %v81, %v87
    %v90 = vld [vmem:[%s3] sm:$0x1]
    %92 = vset.pattern.permute.xlu0 0
    %93 = vperm.xlu0 %92, %v56
    %v94 = vpop.permute.xlu0 %93
    %v96 = vlaneseq
    %v97 = vshrl.u32 %v96, 7
    %v98 = vsub.s32 0, %v97
    %v99 = vrot.slane %v90, %v98
    %v100 = vmul.f32 %v94, %v99
    %v101 = vadd.f32 %v89, %v100
    %v102 = vld [vmem:[%s3 + $0x1] sm:$0x1]
    %103 = vset.pattern.permute.xlu0 1
    %104 = vperm.xlu0 %103, %v56
    %v105 = vpop.permute.xlu0 %104
    %v107 = vlaneseq
    %v108 = vshrl.u32 %v107, 7
    %v109 = vsub.s32 0, %v108
    %v110 = vrot.slane %v102, %v109
    %v111 = vmul.f32 %v105, %v110
    %v112 = vadd.f32 %v101, %v111
    %v113 = vld [vmem:[%s4] sm:$0x1]
    %v115 = vlaneseq
    %v116 = vshrl.u32 %v115, 7
    %v117 = vsub.s32 0, %v116
    %v118 = vrot.slane %v113, %v117
    %v120 = vadd.f32 %v112, %v118
    %v121 = vmax.f32 %v120, 0.0
    %v122 = vpack.c.bf16 %v121, %v121
    %v123 = vld [vmem:[#allocation5] sm:$0xf]
    %v124 = vld [vmem:[#allocation5 + $0x4] sm:$0xf]
    %v125 = vld [vmem:[#allocation5 + $0x8] sm:$0xf]
    %v126 = vld [vmem:[#allocation5 + $0xc] sm:$0xf]
    %v127 = vld [vmem:[#allocation5 + $0x10] sm:$0xf]
    %v128 = vld [vmem:[#allocation5 + $0x14] sm:$0xf]
    %v129 = vld [vmem:[#allocation5 + $0x18] sm:$0xf]
    %v130 = vld [vmem:[#allocation5 + $0x1c] sm:$0xf]
    %v131 = vld [vmem:[#allocation5 + $0x20] sm:$0xf]
    %v132 = vld [vmem:[#allocation5 + $0x24] sm:$0xf]
    %v133 = vld [vmem:[#allocation5 + $0x28] sm:$0xf]
    %v134 = vld [vmem:[#allocation5 + $0x2c] sm:$0xf]
    %v135 = vld [vmem:[#allocation5 + $0x30] sm:$0xf]
    %v136 = vld [vmem:[#allocation5 + $0x34] sm:$0xf]
    %v137 = vld [vmem:[#allocation5 + $0x38] sm:$0xf]
    %v138 = vld [vmem:[#allocation5 + $0x3c] sm:$0xf]
    %v139 = vld [vmem:[%s6] sm:$0x1]
    %v141 = vlaneseq
    %v142 = vshrl.u32 %v141, 7
    %v143 = vsub.s32 0, %v142
    %v144 = vrot.slane %v139, %v143
    %v162 = vunpack.c.l.b16 %v123
    %v163 = vunpack.c.l.b16 %v124
    %v164 = vunpack.c.l.b16 %v125
    %v165 = vunpack.c.l.b16 %v126
    %v166 = vunpack.c.l.b16 %v127
    %v167 = vunpack.c.l.b16 %v128
    %v168 = vunpack.c.l.b16 %v129
    %v169 = vunpack.c.l.b16 %v130
    %v170 = vunpack.c.l.b16 %v131
    %v171 = vunpack.c.l.b16 %v132
    %v172 = vunpack.c.l.b16 %v133
    %v173 = vunpack.c.l.b16 %v134
    %v174 = vunpack.c.l.b16 %v135
    %v175 = vunpack.c.l.b16 %v136
    %v176 = vunpack.c.l.b16 %v137
    %v177 = vunpack.c.l.b16 %v138
    %v178 = vpack.c.b16 %v163, %v162
    %v179 = vpack.c.b16 %v165, %v164
    %v180 = vpack.c.b16 %v167, %v166
    %v181 = vpack.c.b16 %v169, %v168
    %v182 = vpack.c.b16 %v171, %v170
    %v183 = vpack.c.b16 %v173, %v172
    %v184 = vpack.c.b16 %v175, %v174
    %v185 = vpack.c.b16 %v177, %v176
    %194 = vmatprep.subr.bf16.mxu0 0
    %195 = vmatpush1.bf16.msra.mxu0 %v178
    %196 = vmatprep.subr.bf16.mxu0 0
    %197 = vmatpush1.bf16.msra.mxu0 %v179
    %198 = vmatprep.subr.bf16.mxu0 0
    %199 = vmatpush1.bf16.msra.mxu0 %v180
    %200 = vmatprep.subr.bf16.mxu0 0
    %201 = vmatpush1.bf16.msra.mxu0 %v181
    %202 = vmatprep.subr.bf16.mxu0 0
    %203 = vmatpush1.bf16.msra.mxu0 %v182
    %204 = vmatprep.subr.bf16.mxu0 0
    %205 = vmatpush1.bf16.msra.mxu0 %v183
    %206 = vmatprep.subr.bf16.mxu0 0
    %207 = vmatpush1.bf16.msra.mxu0 %v184
    %208 = vmatprep.subr.bf16.mxu0 0
    %209 = vmatpush1.bf16.msra.mxu0 %v185
    %210 = vmatprep.subr.bf16.mxu0 0
    %211 = vmatpush1.bf16.msra.mxu0 0
    %212 = vmatprep.subr.bf16.mxu0 0
    %213 = vmatpush1.bf16.msra.mxu0 0
    %214 = vmatprep.subr.bf16.mxu0 0
    %215 = vmatpush1.bf16.msra.mxu0 0
    %216 = vmatprep.subr.bf16.mxu0 0
    %217 = vmatpush1.bf16.msra.mxu0 0
    %218 = vmatprep.subr.bf16.mxu0 0
    %219 = vmatpush1.bf16.msra.mxu0 0
    %220 = vmatprep.subr.bf16.mxu0 0
    %221 = vmatpush1.bf16.msra.mxu0 0
    %222 = vmatprep.subr.bf16.mxu0 0
    %223 = vmatpush1.bf16.msra.mxu0 0
    %224 = vmatprep.subr.bf16.mxu0 0
    %225 = vmatpush1.bf16.msra.mxu0 0
    %226 = vmatprep.mubr.bf16.mxu0 0
    %227 = vmatmul.mubr.bf16.gmra.mrb[0].mxu0 %v122
    %v228 = vpop.f32.mrb[0].mxu0
    %v229 = vadd.f32 %v144, %v228
    %v230 = vpop.f32.mrb[0].mxu0
    %v231 = vpop.f32.mrb[0].mxu0
    %v232 = vpop.f32.mrb[0].mxu0
    %233 = vdwg.mxu0
    %v234 = vmax.f32 %v229, 0.0
    %235 = vst [vmem:[#allocation7] sm:$0xff] %v234
    // Predicated region
    $region38: #{tpu_custom_call.1} parent=1 // pred_check
      _
    $region39: #{tpu_custom_call.1} parent=1 // pred_check_branch
      %237 = sbr.rel (0) target = $region41
    $region40: #{tpu_custom_call.1} parent=1 // pred_region
      %s239 = ssub.s32 128, 128
      %240 = vsyncadd [#allocation4], %s239
      %s242 = sshll.u32 [#allocation7], 4
      %s243 = int_to_ptr.vmem [resolvable:$true] %s242
      %245 = dma.vmem_to_hbm [thread:$0]  %s243, 128, %s7, [#allocation4]
    $region41: #{tpu_custom_call.1} parent=1 // pred_fallthru
      _
    // Predicated region
    $region42: #{tpu_custom_call.1} parent=1 // pred_check
      _
    $region43: #{tpu_custom_call.1} parent=1 // pred_check_branch
      %247 = sbr.rel (0) target = $region45
    $region44: #{tpu_custom_call.1} parent=1 // pred_region
      %248 = dma.done [#allocation4], 128
    $region45: #{tpu_custom_call.1} parent=1 // pred_fallthru
      _
    %249 = vsyncpa [#allocation3], 1
    %250 = vsyncpa [#allocation6], 1
    %251 = vsyncpa [#allocation4], 1

</llo_original>
